<compile_context>
chip_gen: v5e
topology: v5e:2x2
jax: 0.10.0
libtpu: 0.0.40
codegen_flags: <defaults>
</compile_context>

<pallas_src>
import jax
import jax.numpy as jnp
from jax.experimental import pallas as pl
from jax.experimental.pallas import tpu as pltpu


_VMEM_LIMIT = 32 * 1024 * 1024  # safe on v5e/v6e (128 MiB) and v7x (64 MiB)


def _pick_tile(dim, candidates):
    """Largest candidate tile that divides `dim`; fall back to the full dim."""
    for c in candidates:
        if c <= dim and dim % c == 0:
            return c
    return dim


# ----------------------------------------------------------------------------
# Kernel 1: tiled bf16 matmul (MXU, f32 accumulation) — stand-in Model proj.
# ----------------------------------------------------------------------------
def _matmul_kernel(a_ref, b_ref, o_ref, acc_ref):
    @pl.when(pl.program_id(2) == 0)
    def _init():
        acc_ref[...] = jnp.zeros_like(acc_ref)

    acc_ref[...] += jnp.dot(a_ref[...], b_ref[...],
                            preferred_element_type=jnp.float32)

    @pl.when(pl.program_id(2) == pl.num_programs(2) - 1)
    def _done():
        o_ref[...] = acc_ref[...].astype(o_ref.dtype)


def matmul_bf16(a, b, out_dtype=jnp.float32):
    M, K = a.shape
    K2, N = b.shape
    assert K == K2
    a = a.astype(jnp.bfloat16)
    b = b.astype(jnp.bfloat16)
    # MXU-friendly tiles; K tile must divide exactly (accumulation correctness),
    # so the picker falls back to the full extent when nothing nice divides.
    tm = _pick_tile(M, (256, 128, 64, 32, 16, 8))
    tn = _pick_tile(N, (512, 256, 128))
    tk = _pick_tile(K, (512, 256, 128))
    return pl.pallas_call(
        _matmul_kernel,
        out_shape=jax.ShapeDtypeStruct((M, N), out_dtype),
        grid_spec=pltpu.PrefetchScalarGridSpec(
            num_scalar_prefetch=0,
            grid=(M // tm, N // tn, K // tk),
            in_specs=[pl.BlockSpec((tm, tk), lambda i, j, k: (i, k)),
                      pl.BlockSpec((tk, tn), lambda i, j, k: (k, j))],
            out_specs=pl.BlockSpec((tm, tn), lambda i, j, k: (i, j)),
            scratch_shapes=[pltpu.VMEM((tm, tn), jnp.float32)]),
        compiler_params=pltpu.CompilerParams(
            dimension_semantics=("parallel", "parallel", "arbitrary"),
            vmem_limit_bytes=_VMEM_LIMIT),
    )(a, b)


# ----------------------------------------------------------------------------
# Kernel 2: fused LM-head matmul + per-token cross-entropy.
#   Tiles over (rows, vocab); the vocab axis is a reduction with an online
#   max / sum-exp / picked-logit accumulator, so the logits tensor is never
#   written to HBM.  loss = logsumexp(h @ W) - (h @ W)[label]
# ----------------------------------------------------------------------------
def fused_lmhead_cross_entropy(hidden, w_lm, labels, *, tr_target=256,
                               tv_target=512):
    N, D = hidden.shape
    D2, V = w_lm.shape
    assert D == D2
    hidden = hidden.astype(jnp.bfloat16)
    w_lm = w_lm.astype(jnp.bfloat16)
    labels2d = labels.reshape(N, 1).astype(jnp.int32)

    tr = min(tr_target, N)      # full dim or a multiple of 8
    tv = min(tv_target, V)      # full dim or a multiple of 128
    n_r = pl.cdiv(N, tr)
    n_v = pl.cdiv(V, tv)
    vocab_needs_mask = (V % tv) != 0

    def _kernel(h_ref, w_ref, lab_ref, out_ref, m_ref, s_ref, p_ref):
        j = pl.program_id(1)

        @pl.when(j == 0)
        def _init():
            m_ref[...] = jnp.full_like(m_ref, -jnp.inf)
            s_ref[...] = jnp.zeros_like(s_ref)
            p_ref[...] = jnp.zeros_like(p_ref)

        logits = jnp.dot(h_ref[...], w_ref[...],
                         preferred_element_type=jnp.float32)       # (tr, tv) f32
        col = jax.lax.broadcasted_iota(jnp.int32, logits.shape, 1) + j * tv
        if vocab_needs_mask:                                       # static
            logits = jnp.where(col < V, logits, -jnp.inf)

        m_prev = m_ref[...]
        m_new = jnp.maximum(m_prev, jnp.max(logits, axis=-1, keepdims=True))
        s_ref[...] = (s_ref[...] * jnp.exp(m_prev - m_new)
                      + jnp.sum(jnp.exp(logits - m_new), axis=-1, keepdims=True))
        m_ref[...] = m_new
        p_ref[...] += jnp.sum(jnp.where(col == lab_ref[...], logits, 0.0),
                              axis=-1, keepdims=True)

        @pl.when(j == pl.num_programs(1) - 1)
        def _done():
            out_ref[...] = m_ref[...] + jnp.log(s_ref[...]) - p_ref[...]

    out = pl.pallas_call(
        _kernel,
        out_shape=jax.ShapeDtypeStruct((N, 1), jnp.float32),
        grid_spec=pltpu.PrefetchScalarGridSpec(
            num_scalar_prefetch=0,
            grid=(n_r, n_v),
            in_specs=[pl.BlockSpec((tr, D), lambda i, j: (i, 0)),
                      pl.BlockSpec((D, tv), lambda i, j: (0, j)),
                      pl.BlockSpec((tr, 1), lambda i, j: (i, 0))],
            out_specs=pl.BlockSpec((tr, 1), lambda i, j: (i, 0)),
            scratch_shapes=[pltpu.VMEM((tr, 1), jnp.float32),
                            pltpu.VMEM((tr, 1), jnp.float32),
                            pltpu.VMEM((tr, 1), jnp.float32)]),
        compiler_params=pltpu.CompilerParams(
            dimension_semantics=("parallel", "arbitrary"),
            vmem_limit_bytes=_VMEM_LIMIT),
    )(hidden, w_lm, labels2d)
    return out[:, 0]


# ----------------------------------------------------------------------------
# Kernel 3: flow-matching loss, sequence-tiled:
#   per-token loss = mean_D (y - target)^2
#   per-batch loss = sum_S(mask * per_token) / sum_S(mask)   (guarded)
# ----------------------------------------------------------------------------
def fm_masked_loss(y, x_start, loss_mask, *, ts_target=512):
    B, S, D = y.shape
    mask3 = loss_mask.reshape(B, S, 1).astype(jnp.float32)
    ts = min(ts_target, S)
    n_s = pl.cdiv(S, ts)
    seq_needs_mask = (S % ts) != 0

    def _kernel(y_ref, x_ref, m_ref, out_ref, num_ref, den_ref):
        s = pl.program_id(1)

        @pl.when(s == 0)
        def _init():
            num_ref[...] = jnp.zeros_like(num_ref)
            den_ref[...] = jnp.zeros_like(den_ref)

        d = y_ref[...].astype(jnp.float32) - x_ref[...].astype(jnp.float32)
        per_tok = jnp.mean(d * d, axis=-1, keepdims=True)          # (1, ts, 1)
        m = m_ref[...]
        if seq_needs_mask:                                         # static
            pos = jax.lax.broadcasted_iota(jnp.int32, m.shape, 1) + s * ts
            valid = pos < S
            m = jnp.where(valid, m, 0.0)
            per_tok = jnp.where(valid, per_tok, 0.0)
        num_ref[...] += jnp.sum(m * per_tok, axis=1, keepdims=True)
        den_ref[...] += jnp.sum(m, axis=1, keepdims=True)

        @pl.when(s == pl.num_programs(1) - 1)
        def _done():
            den = den_ref[...]
            out_ref[...] = (jnp.where(den > 0.0, num_ref[...], 0.0)
                            / jnp.where(den > 0.0, den, 1.0))

    out = pl.pallas_call(
        _kernel,
        out_shape=jax.ShapeDtypeStruct((B, 1, 1), jnp.float32),
        grid_spec=pltpu.PrefetchScalarGridSpec(
            num_scalar_prefetch=0,
            grid=(B, n_s),
            in_specs=[pl.BlockSpec((1, ts, D), lambda b, s: (b, s, 0)),
                      pl.BlockSpec((1, ts, D), lambda b, s: (b, s, 0)),
                      pl.BlockSpec((1, ts, 1), lambda b, s: (b, s, 0))],
            out_specs=pl.BlockSpec((1, 1, 1), lambda b, s: (b, 0, 0)),
            scratch_shapes=[pltpu.VMEM((1, 1, 1), jnp.float32),
                            pltpu.VMEM((1, 1, 1), jnp.float32)]),
        compiler_params=pltpu.CompilerParams(
            dimension_semantics=("parallel", "arbitrary")),
    )(y, x_start, mask3)
    return out[:, 0, 0]


# ----------------------------------------------------------------------------
# Kernel 4: masked per-row reduction over sequence of a per-token loss:
#   out[r] = sum_S(mask * loss) / sum_S(mask)  (guarded; ones mask == mean(-1))
# ----------------------------------------------------------------------------
def masked_seq_reduce(per_token, mask, *, ts_target=512):
    R, S = per_token.shape
    l3 = per_token.reshape(R, S, 1).astype(jnp.float32)
    m3 = mask.reshape(R, S, 1).astype(jnp.float32)
    ts = min(ts_target, S)
    n_s = pl.cdiv(S, ts)
    seq_needs_mask = (S % ts) != 0

    def _kernel(l_ref, m_ref, out_ref, num_ref, den_ref):
        s = pl.program_id(1)

        @pl.when(s == 0)
        def _init():
            num_ref[...] = jnp.zeros_like(num_ref)
            den_ref[...] = jnp.zeros_like(den_ref)

        l = l_ref[...]
        m = m_ref[...]
        if seq_needs_mask:                                         # static
            pos = jax.lax.broadcasted_iota(jnp.int32, m.shape, 1) + s * ts
            valid = pos < S
            m = jnp.where(valid, m, 0.0)
            l = jnp.where(valid, l, 0.0)
        num_ref[...] += jnp.sum(m * l, axis=1, keepdims=True)
        den_ref[...] += jnp.sum(m, axis=1, keepdims=True)

        @pl.when(s == pl.num_programs(1) - 1)
        def _done():
            den = den_ref[...]
            out_ref[...] = (jnp.where(den > 0.0, num_ref[...], 0.0)
                            / jnp.where(den > 0.0, den, 1.0))

    out = pl.pallas_call(
        _kernel,
        out_shape=jax.ShapeDtypeStruct((R, 1, 1), jnp.float32),
        grid_spec=pltpu.PrefetchScalarGridSpec(
            num_scalar_prefetch=0,
            grid=(R, n_s),
            in_specs=[pl.BlockSpec((1, ts, 1), lambda r, s: (r, s, 0)),
                      pl.BlockSpec((1, ts, 1), lambda r, s: (r, s, 0))],
            out_specs=pl.BlockSpec((1, 1, 1), lambda r, s: (r, 0, 0)),
            scratch_shapes=[pltpu.VMEM((1, 1, 1), jnp.float32),
                            pltpu.VMEM((1, 1, 1), jnp.float32)]),
        compiler_params=pltpu.CompilerParams(
            dimension_semantics=("parallel", "arbitrary")),
    )(l3, m3)
    return out[:, 0, 0]


# ----------------------------------------------------------------------------
# Kernel 5: data/noise interpolation + conditioning restore, sequence-tiled:
#   x_t = x0 + (noise - x0) * t_scaled ; where(mask == 0, x0, x_t)
# ----------------------------------------------------------------------------
def interpolate_and_mask(x_start, noise, t_scaled, input_ids_mask, *,
                         ts_target=512):
    B, S, D = x_start.shape
    t3 = t_scaled.reshape(B, 1, 1).astype(jnp.float32)
    m3 = input_ids_mask.reshape(B, S, 1).astype(jnp.float32)
    ts = min(ts_target, S)
    n_s = pl.cdiv(S, ts)

    def _kernel(x_ref, n_ref, t_ref, m_ref, o_ref):
        x = x_ref[...]
        xt = x + (n_ref[...] - x) * t_ref[...]
        o_ref[...] = jnp.where(m_ref[...] == 0.0, x, xt)

    return pl.pallas_call(
        _kernel,
        out_shape=jax.ShapeDtypeStruct((B, S, D), jnp.float32),
        grid_spec=pltpu.PrefetchScalarGridSpec(
            num_scalar_prefetch=0,
            grid=(B, n_s),
            in_specs=[pl.BlockSpec((1, ts, D), lambda b, s: (b, s, 0)),
                      pl.BlockSpec((1, ts, D), lambda b, s: (b, s, 0)),
                      pl.BlockSpec((1, 1, 1), lambda b, s: (b, 0, 0)),
                      pl.BlockSpec((1, ts, 1), lambda b, s: (b, s, 0))],
            out_specs=pl.BlockSpec((1, ts, D), lambda b, s: (b, s, 0))),
        compiler_params=pltpu.CompilerParams(
            dimension_semantics=("parallel", "parallel")),
    )(x_start, noise, t3, m3)


# ----------------------------------------------------------------------------
# FlowNllCriterion.forward
# ----------------------------------------------------------------------------
def flow_nll_forward(params, seqs, padding_mask, input_ids_mask, t, noise,
                     diffusion_steps):
    E = params["embedding"]      # (V, D)  — model.get_embeddings table
    W_model = params["w_model"]  # (D, D)  — stand-in Model projection
    W_lm = params["w_lm"]        # (D, V)  — model.compute_logits head

    B, S = seqs.shape
    D = E.shape[1]

    # ---- _prepare_batch -----------------------------------------------------
    # TODO(synk): embedding gather stays in plain JAX (jnp.take).
    x_start = jnp.take(E, seqs, axis=0)                           # (B, S, D)
    t_scaled = t.astype(jnp.float32) * (1.0 / diffusion_steps)    # scale_t
    x_t = interpolate_and_mask(x_start, noise, t_scaled, input_ids_mask)

    loss_mask = (padding_mask * input_ids_mask).astype(jnp.float32)

    # ---- FlowMatchingCriterion ----------------------------------------------
    # target = x_start (x0-prediction); model output via stand-in bf16 linear.
    y = matmul_bf16(x_t.reshape(B * S, D), W_model).reshape(B, S, D)

    # flow_matching_loss: per-token MSE over D, masked per-batch mean over S
    flow_matching_loss = fm_masked_loss(y, x_start, loss_mask)     # (B,)

    # One fused LM-head + CE pass over [y ; x_start]: W_lm streamed once,
    # logits never materialized in HBM.
    h_all = jnp.concatenate(
        [y.reshape(B * S, D).astype(jnp.bfloat16),
         x_start.reshape(B * S, D).astype(jnp.bfloat16)], axis=0)  # (2BS, D)
    labels_all = jnp.concatenate([seqs.reshape(-1), seqs.reshape(-1)], axis=0)
    ce_all = fused_lmhead_cross_entropy(h_all, W_lm, labels_all)   # (2BS,)
    dec_ce = ce_all[:B * S].reshape(B, S)
    emb_ce = ce_all[B * S:].reshape(B, S)

    # Single reduction kernel call for both CE losses:
    #   decoder_loss uses loss_mask; embedding_loss is a plain mean over S.
    tok_losses = jnp.concatenate([dec_ce, emb_ce], axis=0)         # (2B, S)
    tok_masks = jnp.concatenate(
        [loss_mask, jnp.ones_like(loss_mask)], axis=0)             # (2B, S)
    per_batch = masked_seq_reduce(tok_losses, tok_masks)           # (2B,)
    decoder_loss = per_batch[:B]
    embedding_loss = per_batch[B:]

    total_loss = jnp.mean(flow_matching_loss) + jnp.mean(embedding_loss)

    return {
        "flow_matching_loss": flow_matching_loss,
        "embedding_loss": embedding_loss,
        "decoder_loss": decoder_loss,
        "loss": total_loss,
        "timestep": t,
    }


if __name__ == "__main__":
    B, S, D, V = 2, 8, 32, 128
    diffusion_steps = 2048

    key = jax.random.PRNGKey(0)
    k_emb, k_w, k_seq, k_t, k_noise = jax.random.split(key, 5)

    # deterministic parameter init
    E = jax.random.normal(k_emb, (V, D), jnp.float32) * 0.02
    W_model = jax.random.normal(k_w, (D, D), jnp.float32) / jnp.sqrt(D)
    W_lm = E.T  # tied decoder head for compute_logits
    params = {"embedding": E, "w_model": W_model, "w_lm": W_lm}

    # deterministic example batch
    seqs = jax.random.randint(k_seq, (B, S), 0, V, jnp.int32)
    padding_mask = jnp.ones((B, S), jnp.float32)
    input_ids_mask = jnp.concatenate(
        [jnp.zeros((B, S // 2), jnp.float32),
         jnp.ones((B, S // 2), jnp.float32)], axis=1)
    t = jax.random.randint(k_t, (B,), 0, diffusion_steps, jnp.int32)  # sampler
    noise = jax.random.normal(k_noise, (B, S, D), jnp.float32)

    out = flow_nll_forward(params, seqs, padding_mask, input_ids_mask, t,
                           noise, diffusion_steps)
    out = jax.tree_util.tree_map(jax.block_until_ready, out)

    assert out["flow_matching_loss"].shape == (B,)
    assert out["embedding_loss"].shape == (B,)
    assert out["decoder_loss"].shape == (B,)
    assert out["loss"].shape == ()
    assert bool(jnp.isfinite(out["loss"]))
    print("KERNEL_OK")
</pallas_src>

<mosaic_0001>
module attributes {stable_mosaic.version = 11 : i64} {
  func.func @_kernel(%arg0: i32, %arg1: i32, %arg2: memref<1x8x32xf32, #tpu.memory_space<vmem>>, %arg3: memref<1x8x32xf32, #tpu.memory_space<vmem>>, %arg4: memref<1x1x1xf32, #tpu.memory_space<vmem>>, %arg5: memref<1x8x1xf32, #tpu.memory_space<vmem>>, %arg6: memref<1x8x32xf32, #tpu.memory_space<vmem>>) attributes {dimension_semantics = [#tpu.dimension_semantics<parallel>, #tpu.dimension_semantics<parallel>], iteration_bounds = array<i64: 2, 1>, scalar_prefetch = 0 : i64, scratch_operands = 0 : i64, tpu.core_type = #tpu.core_type<tc>, window_params = [{transform_indices = @transform_0, window_bounds = array<i64: 1, 8, 32>}, {transform_indices = @transform_1, window_bounds = array<i64: 1, 8, 32>}, {transform_indices = @transform_2, window_bounds = array<i64: 1, 1, 1>}, {transform_indices = @transform_3, window_bounds = array<i64: 1, 8, 1>}, {transform_indices = @transform_4, window_bounds = array<i64: 1, 8, 32>}]} {
    %c0 = arith.constant 0 : index
    %c0_0 = arith.constant 0 : index
    %c0_1 = arith.constant 0 : index
    %0 = vector.load %arg2[%c0, %c0_0, %c0_1] : memref<1x8x32xf32, #tpu.memory_space<vmem>>, vector<1x8x32xf32>
    %c0_2 = arith.constant 0 : index
    %c0_3 = arith.constant 0 : index
    %c0_4 = arith.constant 0 : index
    %1 = vector.load %arg3[%c0_2, %c0_3, %c0_4] : memref<1x8x32xf32, #tpu.memory_space<vmem>>, vector<1x8x32xf32>
    %2 = arith.subf %1, %0 : vector<1x8x32xf32>
    %c0_5 = arith.constant 0 : index
    %c0_6 = arith.constant 0 : index
    %c0_7 = arith.constant 0 : index
    %3 = vector.load %arg4[%c0_5, %c0_6, %c0_7] : memref<1x1x1xf32, #tpu.memory_space<vmem>>, vector<1x1x1xf32>
    %4 = vector.broadcast %3 : vector<1x1x1xf32> to vector<1x8x32xf32>
    %5 = arith.mulf %2, %4 : vector<1x8x32xf32>
    %6 = arith.addf %0, %5 : vector<1x8x32xf32>
    %c0_8 = arith.constant 0 : index
    %c0_9 = arith.constant 0 : index
    %c0_10 = arith.constant 0 : index
    %7 = vector.load %arg5[%c0_8, %c0_9, %c0_10] : memref<1x8x1xf32, #tpu.memory_space<vmem>>, vector<1x8x1xf32>
    %cst = arith.constant 0.000000e+00 : f32
    %8 = vector.broadcast %cst : f32 to vector<1x8x1xf32>
    %9 = arith.cmpf oeq, %7, %8 : vector<1x8x1xf32>
    %10 = vector.shape_cast %9 : vector<1x8x1xi1> to vector<1x8x1xi1>
    %11 = vector.broadcast %10 : vector<1x8x1xi1> to vector<1x8x32xi1>
    %12 = arith.select %11, %0, %6 : vector<1x8x32xi1>, vector<1x8x32xf32>
    %c0_11 = arith.constant 0 : index
    %c0_12 = arith.constant 0 : index
    %c0_13 = arith.constant 0 : index
    %13 = vector.load %arg6[%c0_11, %c0_12, %c0_13] : memref<1x8x32xf32, #tpu.memory_space<vmem>>, vector<1x8x32xf32>
    tpu.vector_store %arg6[%c0_11, %c0_12, %c0_13], %12 {strides = array<i32>} : memref<1x8x32xf32, #tpu.memory_space<vmem>>, vector<1x8x32xf32>,
    return
  }
  func.func @transform_0(%arg0: i32, %arg1: i32) -> (i32, i32, i32) {
    %c0_i32 = arith.constant 0 : i32
    %c0_i32_0 = arith.constant 0 : i32
    return %arg0, %arg1, %c0_i32 : i32, i32, i32
  }
  func.func @transform_1(%arg0: i32, %arg1: i32) -> (i32, i32, i32) {
    %c0_i32 = arith.constant 0 : i32
    %c0_i32_0 = arith.constant 0 : i32
    return %arg0, %arg1, %c0_i32 : i32, i32, i32
  }
  func.func @transform_2(%arg0: i32, %arg1: i32) -> (i32, i32, i32) {
    %c0_i32 = arith.constant 0 : i32
    %c0_i32_0 = arith.constant 0 : i32
    %c0_i32_1 = arith.constant 0 : i32
    return %arg0, %c0_i32, %c0_i32_0 : i32, i32, i32
  }
  func.func @transform_3(%arg0: i32, %arg1: i32) -> (i32, i32, i32) {
    %c0_i32 = arith.constant 0 : i32
    %c0_i32_0 = arith.constant 0 : i32
    return %arg0, %arg1, %c0_i32 : i32, i32, i32
  }
  func.func @transform_4(%arg0: i32, %arg1: i32) -> (i32, i32, i32) {
    %c0_i32 = arith.constant 0 : i32
    %c0_i32_0 = arith.constant 0 : i32
    return %arg0, %arg1, %c0_i32 : i32, i32, i32
  }
}

</mosaic_0001>

<llo_original>
// kernel: tpu_custom_call.1
$region0: #{tpu_custom_call.1}
  #allocation0 [shape = 'u32[]', space=smem, size = 0x4, offset = 0x4, fixed_abs, tag = 'smem constant byte address 0x4 - core index']
  #allocation1 [shape = 'u32[72,128]{1,0:T(1,128)}', space=vmem, size = 0x9000, scoped, tag = 'internal scratch']
  %s0 = inlined_call_operand.vmem [shape: f32[2,8,32], index: 0, kind: input, shape index: {}]
  %s1 = inlined_call_operand.hbm [shape: f32[2,8,32], index: 1, kind: input, shape index: {}]
  %s2 = inlined_call_operand.vmem [shape: f32[2,1,1], index: 2, kind: input, shape index: {}]
  %s3 = inlined_call_operand.vmem [shape: f32[2,8,1], index: 3, kind: input, shape index: {}]
  %s4 = inlined_call_operand.hbm [shape: f32[2,8,32], index: 4, kind: output, shape index: {}]
  %s5 = sld [smem:[#allocation0]]
  $region53: #{tpu_custom_call.1} parent=0
    _
  %s7 = ssub.s32 1, %s5
  %s8 = scalar_select 0, %s7, %s5
  $region1: #{tpu_custom_call.1} parent=0
    #allocation2 [shape = 'u8[8192]{0}', space=vmem, size = 0x2000, scoped, tag = 'input window, operand 1']
    #allocation3 [shape = 's32[2]{0}', space=sflag, size = 0x8, scoped, tag = 'scoped memory for tpu_custom_call.1']
    #allocation4 [shape = 's32[2]{0}', space=sflag, size = 0x8, scoped, tag = 'scoped memory for tpu_custom_call.1']
    #allocation5 [shape = 'u8[8192]{0}', space=vmem, size = 0x2000, scoped, tag = 'output window, operand 0']
    %9 = vsyncpa [#allocation3], 0
    %s10 = scalar_lea.sflag [#allocation3], 1
    %11 = vsyncpa %s10, 0
    %12 = vsyncpa [#allocation4], 0
    %s13 = scalar_lea.sflag [#allocation4], 1
    %14 = vsyncpa %s13, 0
    loop: start=0, step=1, limit=4
    $region2: #{tpu_custom_call.1} parent=1 // loop_pre_header
      _
    $region3: #{tpu_custom_call.1} parent=1 // loop_header
      %s16 = sphi 0, %s20
      %p17 = scmp.ge.s32.totalorder %s16, 4
      %s23 = sphi 0, %s35
      %s24 = sphi 0, %s31
      %s25 = sphi 0, %s23
      %s26 = sphi 0, %s24
      %s27 = sphi 0, %s25
      %s28 = sphi 0, %s26
      %s40 = sphi 0, %s42
      %s43 = sphi 0, %s40
      %s44 = sphi 0, %s43
      %s60 = sphi 0, %s44
      %s68 = sphi 0, %s70
      %s71 = sphi 0, %s68
      %s72 = sphi 0, %s71
      %s88 = sphi 0, %s72
      %s94 = sphi 0, %s96
      %s97 = sphi 0, %s94
      %s98 = sphi 0, %s97
      %s114 = sphi 0, %s98
      %s122 = sphi 0, %s124
      %s125 = sphi 0, %s122
      %s126 = sphi 0, %s125
      %s142 = sphi 0, %s126
      %s150 = sphi 0, %s152
      %s153 = sphi 0, %s150
      %s154 = sphi 0, %s153
      %s170 = sphi 0, %s154
    $region4: #{tpu_custom_call.1} parent=1 // loop_header_branch
      %19 = sbr.rel (%p17) target = $region8
    $region5: #{tpu_custom_call.1} parent=1 // loop_body
      %s21 = ssub.s32 %s16, 1
      %s22 = ssub.s32 %s16, 2
      %s29 = sadd.s32 1, %s24
      %p30 = scmp.ge.s32.totalorder %s29, 1
      %s31 = scalar_select %p30, 0, %s29
      %s32 = sadd.s32 1, %s23
      %s33 = scalar_select %p30, %s32, %s23
      %p34 = scmp.ge.s32.totalorder %s33, 2
      %s35 = scalar_select %p34, 0, %s33
      %s36 = ssub.s32 %s23, %s35
      %s37 = ssub.s32 %s24, %s31
      %s38 = sor.u32 %s36, %s37
      %p39 = scmp.eq.s32.totalorder %s38, 0
      %s41 = sadd.s32 %s40, 1
      %s42 = scalar_select %p39, %s40, %s41
      %p45 = pneg %p39
      %p46 = scmp.eq.s32.totalorder %s16, 1
      %p47 = por %p45, %p46
      %p48 = scmp.ne.s32.totalorder %s40, %s43
      %p49 = scmp.eq.s32.totalorder %s16, 0
      %p50 = por %p48, %p49
      %p51 = scmp.ne.s32.totalorder %s40, %s43
      %p52 = scmp.eq.s32.totalorder %s21, 1
      %p53 = por %p51, %p52
      %p54 = scmp.ne.s32.totalorder %s43, %s44
      %p55 = scmp.eq.s32.totalorder %s21, 0
      %p56 = por %p54, %p55
      %p57 = scmp.ne.s32.totalorder %s43, %s44
      %p58 = scmp.eq.s32.totalorder %s22, 1
      %p59 = por %p57, %p58
      %p61 = scmp.ne.s32.totalorder %s44, %s60
      %p62 = scmp.eq.s32.totalorder %s22, 0
      %p63 = por %p61, %p62
      %s64 = ssub.s32 %s23, %s35
      %s65 = ssub.s32 %s24, %s31
      %s66 = sor.u32 %s64, %s65
      %p67 = scmp.eq.s32.totalorder %s66, 0
      %s69 = sadd.s32 %s68, 1
      %s70 = scalar_select %p67, %s68, %s69
      %p73 = pneg %p67
      %p74 = scmp.eq.s32.totalorder %s16, 1
      %p75 = por %p73, %p74
      %p76 = scmp.ne.s32.totalorder %s68, %s71
      %p77 = scmp.eq.s32.totalorder %s16, 0
      %p78 = por %p76, %p77
      %p79 = scmp.ne.s32.totalorder %s68, %s71
      %p80 = scmp.eq.s32.totalorder %s21, 1
      %p81 = por %p79, %p80
      %p82 = scmp.ne.s32.totalorder %s71, %s72
      %p83 = scmp.eq.s32.totalorder %s21, 0
      %p84 = por %p82, %p83
      %p85 = scmp.ne.s32.totalorder %s71, %s72
      %p86 = scmp.eq.s32.totalorder %s22, 1
      %p87 = por %p85, %p86
      %p89 = scmp.ne.s32.totalorder %s72, %s88
      %p90 = scmp.eq.s32.totalorder %s22, 0
      %p91 = por %p89, %p90
      %s92 = ssub.s32 %s23, %s35
      %p93 = scmp.eq.s32.totalorder %s92, 0
      %s95 = sadd.s32 %s94, 1
      %s96 = scalar_select %p93, %s94, %s95
      %p99 = pneg %p93
      %p100 = scmp.eq.s32.totalorder %s16, 1
      %p101 = por %p99, %p100
      %p102 = scmp.ne.s32.totalorder %s94, %s97
      %p103 = scmp.eq.s32.totalorder %s16, 0
      %p104 = por %p102, %p103
      %p105 = scmp.ne.s32.totalorder %s94, %s97
      %p106 = scmp.eq.s32.totalorder %s21, 1
      %p107 = por %p105, %p106
      %p108 = scmp.ne.s32.totalorder %s97, %s98
      %p109 = scmp.eq.s32.totalorder %s21, 0
      %p110 = por %p108, %p109
      %p111 = scmp.ne.s32.totalorder %s97, %s98
      %p112 = scmp.eq.s32.totalorder %s22, 1
      %p113 = por %p111, %p112
      %p115 = scmp.ne.s32.totalorder %s98, %s114
      %p116 = scmp.eq.s32.totalorder %s22, 0
      %p117 = por %p115, %p116
      %s118 = ssub.s32 %s23, %s35
      %s119 = ssub.s32 %s24, %s31
      %s120 = sor.u32 %s118, %s119
      %p121 = scmp.eq.s32.totalorder %s120, 0
      %s123 = sadd.s32 %s122, 1
      %s124 = scalar_select %p121, %s122, %s123
      %p127 = pneg %p121
      %p128 = scmp.eq.s32.totalorder %s16, 1
      %p129 = por %p127, %p128
      %p130 = scmp.ne.s32.totalorder %s122, %s125
      %p131 = scmp.eq.s32.totalorder %s16, 0
      %p132 = por %p130, %p131
      %p133 = scmp.ne.s32.totalorder %s122, %s125
      %p134 = scmp.eq.s32.totalorder %s21, 1
      %p135 = por %p133, %p134
      %p136 = scmp.ne.s32.totalorder %s125, %s126
      %p137 = scmp.eq.s32.totalorder %s21, 0
      %p138 = por %p136, %p137
      %p139 = scmp.ne.s32.totalorder %s125, %s126
      %p140 = scmp.eq.s32.totalorder %s22, 1
      %p141 = por %p139, %p140
      %p143 = scmp.ne.s32.totalorder %s126, %s142
      %p144 = scmp.eq.s32.totalorder %s22, 0
      %p145 = por %p143, %p144
      %s146 = ssub.s32 %s23, %s35
      %s147 = ssub.s32 %s24, %s31
      %s148 = sor.u32 %s146, %s147
      %p149 = scmp.eq.s32.totalorder %s148, 0
      %s151 = sadd.s32 %s150, 1
      %s152 = scalar_select %p149, %s150, %s151
      %p155 = pneg %p149
      %p156 = scmp.eq.s32.totalorder %s16, 1
      %p157 = por %p155, %p156
      %p158 = scmp.ne.s32.totalorder %s150, %s153
      %p159 = scmp.eq.s32.totalorder %s16, 0
      %p160 = por %p158, %p159
      %p161 = scmp.ne.s32.totalorder %s150, %s153
      %p162 = scmp.eq.s32.totalorder %s21, 1
      %p163 = por %p161, %p162
      %p164 = scmp.ne.s32.totalorder %s153, %s154
      %p165 = scmp.eq.s32.totalorder %s21, 0
      %p166 = por %p164, %p165
      %p167 = scmp.ne.s32.totalorder %s153, %s154
      %p168 = scmp.eq.s32.totalorder %s22, 1
      %p169 = por %p167, %p168
      %p171 = scmp.ne.s32.totalorder %s154, %s170
      %p172 = scmp.eq.s32.totalorder %s22, 0
      %p173 = por %p171, %p172
      %p174 = scmp.le.s32.totalorder 1, %s16
      %p175 = scmp.lt.s32.totalorder %s16, 3
      %p176 = pnand %p174, %p175
      %p177 = pneg %p176
      // Predicated region
      $region9: #{tpu_custom_call.1} parent=5 // pred_check
        _
      $region10: #{tpu_custom_call.1} parent=5 // pred_check_branch
        %179 = sbr.rel (%p176) target = $region12
      $region11: #{tpu_custom_call.1} parent=5 // pred_region
        %s180 = ssub.s32 %s16, 1
      $region12: #{tpu_custom_call.1} parent=5 // pred_fallthru
        _
      %p181 = scmp.lt.s32.totalorder %s16, 2
      // Predicated region
      $region13: #{tpu_custom_call.1} parent=5 // pred_check
        %p182 = pneg %p181
      $region14: #{tpu_custom_call.1} parent=5 // pred_check_branch
        %184 = sbr.rel (%p182) target = $region16
      $region15: #{tpu_custom_call.1} parent=5 // pred_region
        // Predicated region
        $region17: #{tpu_custom_call.1} parent=15 // pred_check
          %p185 = pneg %p50
        $region18: #{tpu_custom_call.1} parent=15 // pred_check_branch
          %187 = sbr.rel (%p185) target = $region20
        $region19: #{tpu_custom_call.1} parent=15 // pred_region
          %p188 = scmp.lt.s32.totalorder %s23, 1
          %s189 = scalar_select %p188, %s23, 1
          %p190 = scmp.lt.s32.totalorder %s24, 0
          %s191 = scalar_select %p190, %s24, 0
          %s192 = sadd.s32 %s191, %s189
          %s193 = smul.addr %s192, 8
          %s194 = scalar_lea.vmem %s0, %s193
        $region20: #{tpu_custom_call.1} parent=15 // pred_fallthru
          _
        // Predicated region
        $region21: #{tpu_custom_call.1} parent=15 // pred_check
          %p195 = pneg %p78
        $region22: #{tpu_custom_call.1} parent=15 // pred_check_branch
          %197 = sbr.rel (%p195) target = $region24
        $region23: #{tpu_custom_call.1} parent=15 // pred_region
          %s198 = sand.u32 %s68, 1
          %s199 = scalar_lea.sflag [#allocation3], %s198
          %s200 = sand.u32 %s68, 1
          %s201 = smul.addr %s200, 8
          %s202 = scalar_lea.vmem [#allocation2], %s201
          %204 = vsyncadd %s199, 0
          %s205 = sadd.s32 %s24, %s23
          %s206 = smul.addr %s205, 8
          %s207 = scalar_lea.hbm %s1, %s206
          %s209 = sshll.u32 %s207, 4
          %s210 = int_to_ptr.hbm [resolvable:$true] %s209
          %s211 = sshll.u32 %s202, 4
          %s212 = int_to_ptr.vmem [resolvable:$true] %s211
          %214 = dma.hbm_to_vmem [thread:$0]  %s210, 128, %s212, %s199
        $region24: #{tpu_custom_call.1} parent=15 // pred_fallthru
          _
        // Predicated region
        $region25: #{tpu_custom_call.1} parent=15 // pred_check
          %p215 = pneg %p104
        $region26: #{tpu_custom_call.1} parent=15 // pred_check_branch
          %217 = sbr.rel (%p215) target = $region28
        $region27: #{tpu_custom_call.1} parent=15 // pred_region
          %p218 = scmp.lt.s32.totalorder %s23, 1
          %s219 = scalar_select %p218, %s23, 1
          %s220 = scalar_lea.vmem %s2, %s219
        $region28: #{tpu_custom_call.1} parent=15 // pred_fallthru
          _
        // Predicated region
        $region29: #{tpu_custom_call.1} parent=15 // pred_check
          %p221 = pneg %p132
        $region30: #{tpu_custom_call.1} parent=15 // pred_check_branch
          %223 = sbr.rel (%p221) target = $region32
        $region31: #{tpu_custom_call.1} parent=15 // pred_region
          %p224 = scmp.lt.s32.totalorder %s23, 1
          %s225 = scalar_select %p224, %s23, 1
          %p226 = scmp.lt.s32.totalorder %s24, 0
          %s227 = scalar_select %p226, %s24, 0
          %s228 = sadd.s32 %s227, %s225
          %s229 = smul.addr %s228, 8
          %s230 = scalar_lea.vmem %s3, %s229
        $region32: #{tpu_custom_call.1} parent=15 // pred_fallthru
          _
      $region16: #{tpu_custom_call.1} parent=5 // pred_fallthru
        _
      %p231 = scmp.le.s32.totalorder 1, %s16
      %p232 = scmp.lt.s32.totalorder %s16, 3
      %p233 = pnand %p231, %p232
      %p234 = pneg %p233
      // Predicated region
      $region33: #{tpu_custom_call.1} parent=5 // pred_check
        _
      $region34: #{tpu_custom_call.1} parent=5 // pred_check_branch
        %236 = sbr.rel (%p233) target = $region36
      $region35: #{tpu_custom_call.1} parent=5 // pred_region
        %s237 = ssub.s32 %s16, 1
        %s238 = sand.u32 %s71, 1
        %s239 = scalar_lea.sflag [#allocation3], %s238
        %s240 = sand.u32 %s71, 1
        %s241 = smul.addr %s240, 8
        %s242 = scalar_lea.vmem [#allocation2], %s241
        // Predicated region
        $region37: #{tpu_custom_call.1} parent=35 // pred_check
          %p243 = pneg %p84
        $region38: #{tpu_custom_call.1} parent=35 // pred_check_branch
          %245 = sbr.rel (%p243) target = $region40
        $region39: #{tpu_custom_call.1} parent=35 // pred_region
          %247 = dma.done %s239, 128
        $region40: #{tpu_custom_call.1} parent=35 // pred_fallthru
          _
        %p248 = scmp.lt.s32.totalorder %s25, 1
        %s249 = scalar_select %p248, %s25, 1
        %p250 = scmp.lt.s32.totalorder %s26, 0
        %s251 = scalar_select %p250, %s26, 0
        %s252 = sadd.s32 %s251, %s249
        %s253 = smul.addr %s252, 8
        %s254 = scalar_lea.vmem %s0, %s253
        %p255 = pneg %p56
        %p256 = pneg %p53
        %s257 = sand.u32 %s71, 1
        %s258 = scalar_lea.sflag [#allocation3], %s257
        %s259 = sand.u32 %s71, 1
        %s260 = smul.addr %s259, 8
        %s261 = scalar_lea.vmem [#allocation2], %s260
        %p262 = pneg %p84
        %p263 = pneg %p81
        %p264 = scmp.lt.s32.totalorder %s25, 1
        %s265 = scalar_select %p264, %s25, 1
        %s266 = scalar_lea.vmem %s2, %s265
        %p267 = pneg %p110
        %p268 = pneg %p107
        %p269 = scmp.lt.s32.totalorder %s25, 1
        %s270 = scalar_select %p269, %s25, 1
        %p271 = scmp.lt.s32.totalorder %s26, 0
        %s272 = scalar_select %p271, %s26, 0
        %s273 = sadd.s32 %s272, %s270
        %s274 = smul.addr %s273, 8
        %s275 = scalar_lea.vmem %s3, %s274
        %p276 = pneg %p138
        %p277 = pneg %p135
        %p278 = pneg %p166
        %p279 = pneg %p163
        %s280 = sand.u32 %s153, 1
        %s281 = scalar_lea.sflag [#allocation4], %s280
        %s282 = sand.u32 %s153, 1
        %s283 = smul.addr %s282, 8
        %s284 = scalar_lea.vmem [#allocation5], %s283
        %p285 = scmp.lt.s32.totalorder %s25, 1
        %s286 = scalar_select %p285, %s25, 1
        %p287 = scmp.lt.s32.totalorder %s26, 0
        %s288 = scalar_select %p287, %s26, 0
        %s289 = sadd.s32 %s288, %s286
        %s290 = smul.addr %s289, 8
        %s291 = scalar_lea.vmem %s0, %s290
        %p292 = scmp.lt.s32.totalorder %s25, 1
        %s293 = scalar_select %p292, %s25, 1
        %s294 = scalar_lea.vmem %s2, %s293
        %p295 = scmp.lt.s32.totalorder %s25, 1
        %s296 = scalar_select %p295, %s25, 1
        %p297 = scmp.lt.s32.totalorder %s26, 0
        %s298 = scalar_select %p297, %s26, 0
        %s299 = sadd.s32 %s298, %s296
        %s300 = smul.addr %s299, 8
        %s301 = scalar_lea.vmem %s3, %s300
        %v302 = vld [vmem:[%s291] sm:$0xff]
        %v303 = vld [vmem:[%s242] sm:$0xff]
        %v304 = vsub.f32 %v303, %v302
        %v305 = vld [vmem:[%s294] sm:$0x1]
        %v307 = vperm.slane %v305, 0
        %308 = vset.pattern.permute.xlu0 0
        %309 = vperm.xlu0 %308, %v307
        %v310 = vpop.permute.xlu0 %309
        %v312 = vmul.f32 %v304, %v310
        %v313 = vadd.f32 %v302, %v312
        %v314 = vld [vmem:[%s301] sm:$0xff]
        %vm315 = vcmp.eq.f32.partialorder %v314, 0.0
        %v316 = vsel %vm315, 1, 0
        %317 = vset.pattern.permute.xlu0 0
        %318 = vperm.xlu0 %317, %v316
        %v319 = vpop.permute.xlu0 %318
        %vm320 = vcmp.eq.s32.totalorder %v319, 1
        %v321 = vsel %vm320, %v302, %v313
        %vm322 = vcmask 261120
        %323 = vst.msk [vmem:[%s284] sm:$0xff] %vm322, %v321
        %s324 = sand.u32 %s153, 1
        %s325 = scalar_lea.sflag [#allocation4], %s324
        %s326 = sand.u32 %s153, 1
        %s327 = smul.addr %s326, 8
        %s328 = scalar_lea.vmem [#allocation5], %s327
        // Predicated region
        $region41: #{tpu_custom_call.1} parent=35 // pred_check
          %p329 = pneg %p163
        $region42: #{tpu_custom_call.1} parent=35 // pred_check_branch
          %331 = sbr.rel (%p329) target = $region44
        $region43: #{tpu_custom_call.1} parent=35 // pred_region
          %333 = vsyncadd %s325, 0
          %s334 = sadd.s32 %s26, %s25
          %s335 = smul.addr %s334, 8
          %s336 = scalar_lea.hbm %s4, %s335
          %s338 = sshll.u32 %s328, 4
          %s339 = int_to_ptr.vmem [resolvable:$true] %s338
          %s340 = sshll.u32 %s336, 4
          %s341 = int_to_ptr.hbm [resolvable:$true] %s340
          %343 = dma.vmem_to_hbm [thread:$0]  %s339, 128, %s341, %s325
        $region44: #{tpu_custom_call.1} parent=35 // pred_fallthru
          _
      $region36: #{tpu_custom_call.1} parent=5 // pred_fallthru
        _
      %p344 = scmp.le.s32.totalorder 2, %s16
      // Predicated region
      $region45: #{tpu_custom_call.1} parent=5 // pred_check
        %p345 = pneg %p344
      $region46: #{tpu_custom_call.1} parent=5 // pred_check_branch
        %347 = sbr.rel (%p345) target = $region48
      $region47: #{tpu_custom_call.1} parent=5 // pred_region
        %s348 = ssub.s32 %s16, 2
        // Predicated region
        $region49: #{tpu_custom_call.1} parent=47 // pred_check
          %p349 = pneg %p169
        $region50: #{tpu_custom_call.1} parent=47 // pred_check_branch
          %351 = sbr.rel (%p349) target = $region52
        $region51: #{tpu_custom_call.1} parent=47 // pred_region
          %s352 = sand.u32 %s154, 1
          %s353 = scalar_lea.sflag [#allocation4], %s352
          %s354 = sand.u32 %s154, 1
          %s355 = smul.addr %s354, 8
          %s356 = scalar_lea.vmem [#allocation5], %s355
          %358 = dma.done %s353, 128
        $region52: #{tpu_custom_call.1} parent=47 // pred_fallthru
          _
      $region48: #{tpu_custom_call.1} parent=5 // pred_fallthru
        _
    $region6: #{tpu_custom_call.1} parent=1 // loop_footer
      %s20 = sadd.s32 1, %s16
    $region7: #{tpu_custom_call.1} parent=1 // loop_footer_branch
      %15 = sbr.rel target = $region3
    $region8: #{tpu_custom_call.1} parent=1 // loop_exit
      _
    %359 = vsyncpa [#allocation3], 1
    %s360 = scalar_lea.sflag [#allocation3], 1
    %361 = vsyncpa %s360, 1
    %362 = vsyncpa [#allocation4], 1
    %s363 = scalar_lea.sflag [#allocation4], 1
    %364 = vsyncpa %s363, 1

</llo_original>
